<compile_context>
chip_gen: v7x
topology: tpu7x:2x2x1
jax: 0.10.0
libtpu: 0.0.40
codegen_flags: <defaults>
</compile_context>

<pallas_src>
import math

import jax
import jax.numpy as jnp
from jax.experimental import pallas as pl
from jax.experimental.pallas import tpu as pltpu

_GRAY_R, _GRAY_G, _GRAY_B = 0.2989, 0.587, 0.114
_NORM_MEAN = 0.45
_NORM_STD = 0.225


def _cubic_weight(t, A=-0.75):
    # PyTorch bicubic convolution kernel (A = -0.75).
    at = jnp.abs(t)
    at2 = at * at
    at3 = at2 * at
    w1 = (A + 2.0) * at3 - (A + 3.0) * at2 + 1.0
    w2 = A * at3 - 5.0 * A * at2 + 8.0 * A * at - 4.0 * A
    return jnp.where(at <= 1.0, w1, jnp.where(at < 2.0, w2, 0.0))


def _resize_crop_matrix(out_size, in_size, start, length):
    """(out_size, in_size) bicubic weight matrix mapping a [start, start+length)
    crop of the input axis onto out_size samples (align_corners=False, edge clamp).
    `start` / `length` may be traced scalars."""
    yo = jnp.arange(out_size, dtype=jnp.float32)
    src = (yo + 0.5) * (length / out_size) - 0.5
    base = jnp.floor(src)
    W = jnp.zeros((out_size, in_size), jnp.float32)
    for k in range(-1, 3):
        tap = base + k
        wk = _cubic_weight(src - tap)
        tap_cl = jnp.clip(tap, 0.0, length - 1.0)
        idx = (start + tap_cl).astype(jnp.int32)
        W = W + wk[:, None] * jax.nn.one_hot(idx, in_size, dtype=jnp.float32)
    return W
    # TODO(synk): antialiased bicubic downscaling (wider kernel support) not modeled.


def _choose_tiling(B, Win, Wout, rb_max=4):
    """TB = minimal lane-dense column batching (TB*Win and TB*Wout multiples of 128);
    RB (<= rb_max) packs row-groups to cut grid steps; prefer nsteps >= 2 (v7x)."""
    tb = math.lcm(128 // math.gcd(128, Win), 128 // math.gcd(128, Wout))
    groups = -(-B // tb)                    # ceil(B / tb)
    if groups <= 1:
        return tb, 1, 1
    nsteps = max(2, -(-groups // rb_max))
    rb = -(-groups // nsteps)
    nsteps = -(-groups // rb)
    return tb, rb, nsteps


def _make_kernel(RB, Hout):
    rows_per_img = 3 * Hout

    def kernel(params_ref, x_ref, wx_ref, wy_ref, cl_ref, cr_ref, o_ref, img_ref):
        # params (SMEM f32[3]): brightness / contrast / saturation factors, already
        # folded on the host (1.0 when jitter inactive; saturation = 0.0 when
        # RandomGrayscale fires).
        bf = params_ref[0]
        cf = params_ref[1]
        sf = params_ref[2]

        # --- RandomResizedCrop (bicubic) + flip: 2 fused block-diagonal bf16 matmuls ---
        t = jnp.dot(x_ref[...], wx_ref[...],
                    preferred_element_type=jnp.float32)        # (RB*3*Hin, TB*Wout)
        img = jnp.dot(wy_ref[...], t.astype(jnp.bfloat16),
                      preferred_element_type=jnp.float32)      # (RB*3*Hout, TB*Wout)
        img = jnp.clip(img, 0.0, 1.0)                          # torch.clamp(x, 0, 1)

        # --- ColorJitter: brightness (identity when bf == 1) ---
        img = jnp.clip(img * bf, 0.0, 1.0)
        img_ref[...] = img

        # --- ColorJitter: contrast, skipped at runtime when cf == 1 (~60% of calls) ---
        # mean_full = CL @ img @ CR puts every pixel of image (rg, t) at that image's
        # grayscale mean (torchvision adjust_contrast semantics, per image).
        @pl.when(cf != 1.0)
        def _():
            cur = img_ref[...]
            cb = cur.astype(jnp.bfloat16)
            m = jnp.dot(cl_ref[...], cb, preferred_element_type=jnp.float32)
            m = jnp.dot(m.astype(jnp.bfloat16), cr_ref[...],
                        preferred_element_type=jnp.float32)
            img_ref[...] = jnp.clip(cf * cur + (1.0 - cf) * m, 0.0, 1.0)

        # --- ColorJitter saturation + RandomGrayscale (folded: sf == 0 -> grayscale),
        #     GaussianBlur(kernel_size=1) == identity, flip already folded into wx.
        #     Per row-group channel slices: no gray3 concatenate; blended, normalized
        #     and stored directly as lane-dense (Hout, TB*Wout) slabs. ---
        # TODO(synk): hue adjustment and ColorJitter's random op order not implemented.
        inv_std = 1.0 / _NORM_STD
        for r in range(RB):
            base = r * rows_per_img
            c0 = img_ref[pl.ds(base, Hout), :]
            c1 = img_ref[pl.ds(base + Hout, Hout), :]
            c2 = img_ref[pl.ds(base + 2 * Hout, Hout), :]
            gray = _GRAY_R * c0 + _GRAY_G * c1 + _GRAY_B * c2
            for ci, ch in enumerate((c0, c1, c2)):
                v = jnp.clip(sf * ch + (1.0 - sf) * gray, 0.0, 1.0)
                o_ref[pl.ds(base + ci * Hout, Hout), :] = (
                    (v - _NORM_MEAN) * inv_std).astype(o_ref.dtype)

    return kernel


def transformation_forward(x, key, *, crop_size=16, min_scale=0.18, max_scale=1.0,
                           gaussian_prob=0.2, gray_scale_prob=0.2,
                           horizontal_flip_prob=0.5, brightness=0.4, contrast=0.4,
                           saturation=0.2, hue=0.1, color_jitter_prob=0.4, rb_max=4):
    B, C, Hin, Win = x.shape
    assert C == 3, "color pipeline expects 3 channels"
    Hout = Wout = crop_size

    TB, RB, nsteps = _choose_tiling(B, Win, Wout, rb_max)
    B_pad = nsteps * RB * TB

    ks = jax.random.split(key, 10)
    # RandomResizedCrop params (single-attempt simplification of torchvision's loop).
    # TODO(synk): torchvision's 10-attempt sampling with center-crop fallback not modeled.
    area = float(Hin * Win)
    ta = area * jax.random.uniform(ks[0], (), minval=min_scale, maxval=max_scale)
    ar = jnp.exp(jax.random.uniform(ks[1], (), minval=jnp.log(3.0 / 4.0),
                                    maxval=jnp.log(4.0 / 3.0)))
    w = jnp.clip(jnp.round(jnp.sqrt(ta * ar)), 1.0, float(Win))
    h = jnp.clip(jnp.round(jnp.sqrt(ta / ar)), 1.0, float(Hin))
    i = jnp.floor(jax.random.uniform(ks[2], ()) * (Hin - h + 1.0))
    j = jnp.floor(jax.random.uniform(ks[3], ()) * (Win - w + 1.0))

    wy = _resize_crop_matrix(Hout, Hin, i, h)        # (Hout, Hin)
    wxt = _resize_crop_matrix(Wout, Win, j, w).T     # (Win, Wout)

    # RandomHorizontalFlip folded into the column resize weights (flip commutes with
    # the per-pixel color ops that precede it).
    flip_on = jax.random.uniform(ks[4], ()) < horizontal_flip_prob
    wxt = jnp.where(flip_on, wxt[:, ::-1], wxt)

    # Batch-wide color-jitter / grayscale randomness, flags folded into factors so the
    # kernel never branches on full images. GaussianBlur(ks=1) == identity.
    jitter_on = jax.random.uniform(ks[5], ()) < color_jitter_prob
    bf = jnp.where(jitter_on, jax.random.uniform(
        ks[6], (), minval=1.0 - brightness, maxval=1.0 + brightness), 1.0)
    cf = jnp.where(jitter_on, jax.random.uniform(
        ks[7], (), minval=1.0 - contrast, maxval=1.0 + contrast), 1.0)
    sf = jnp.where(jitter_on, jax.random.uniform(
        ks[8], (), minval=1.0 - saturation, maxval=1.0 + saturation), 1.0)
    gray_on = jax.random.uniform(ks[9], ()) < gray_scale_prob
    # RandomGrayscale folded into saturation: sf == 0 reproduces the grayscale blend
    # (exact unless the saturation blend clipped — clamp approximation).
    sf = jnp.where(gray_on, 0.0, sf)
    params = jnp.stack([bf, cf, sf]).astype(jnp.float32)

    # Fused block-diagonal bf16 resize weights:
    #   rows: kron(I_{RB*3}, wy) applied from the left (per-channel H resize)
    #   cols: kron(I_TB, wxt)    applied from the right (per-image W resize)
    wy_big = jnp.kron(jnp.eye(RB * 3, dtype=jnp.float32), wy).astype(jnp.bfloat16)
    wx_big = jnp.kron(jnp.eye(TB, dtype=jnp.float32), wxt).astype(jnp.bfloat16)

    # Constant contrast-mean operators (bf16): mean_full = CL @ img @ CR.
    gw = jnp.repeat(jnp.array([_GRAY_R, _GRAY_G, _GRAY_B], jnp.float32), Hout) / Hout
    kl = jnp.tile(gw[None, :], (3 * Hout, 1))                    # (3*Hout, 3*Hout)
    cl = jnp.kron(jnp.eye(RB, dtype=jnp.float32), kl).astype(jnp.bfloat16)
    cr = jnp.kron(jnp.eye(TB, dtype=jnp.float32),
                  jnp.full((Wout, Wout), 1.0 / Wout, jnp.float32)).astype(jnp.bfloat16)

    # Lane-dense bf16 layout (cast fused into the relayout):
    #   row = rg*3*Hin + c*Hin + h ; col = step*(TB*Win) + t*Win + w
    #   image index = step*(RB*TB) + rg*TB + t
    xp = jnp.pad(x, ((0, B_pad - B), (0, 0), (0, 0), (0, 0))) if B_pad != B else x
    x2d = (xp.astype(jnp.bfloat16)
             .reshape(nsteps, RB, TB, 3, Hin, Win)
             .transpose(1, 3, 4, 0, 2, 5)
             .reshape(RB * 3 * Hin, nsteps * TB * Win))

    kernel = _make_kernel(RB, Hout)
    out2d = pl.pallas_call(
        kernel,
        out_shape=jax.ShapeDtypeStruct((RB * 3 * Hout, nsteps * TB * Wout), jnp.float32),
        grid=(nsteps,),
        in_specs=[
            pl.BlockSpec(memory_space=pltpu.MemorySpace.SMEM),          # folded scalars
            pl.BlockSpec((RB * 3 * Hin, TB * Win), lambda b: (0, b)),   # image slab
            pl.BlockSpec((TB * Win, TB * Wout), lambda b: (0, 0)),      # kron(I_TB, wxt)
            pl.BlockSpec((RB * 3 * Hout, RB * 3 * Hin), lambda b: (0, 0)),   # kron row wy
            pl.BlockSpec((RB * 3 * Hout, RB * 3 * Hout), lambda b: (0, 0)),  # contrast CL
            pl.BlockSpec((TB * Wout, TB * Wout), lambda b: (0, 0)),          # contrast CR
        ],
        out_specs=pl.BlockSpec((RB * 3 * Hout, TB * Wout), lambda b: (0, b)),
        scratch_shapes=[pltpu.VMEM((RB * 3 * Hout, TB * Wout), jnp.float32)],
        compiler_params=pltpu.CompilerParams(dimension_semantics=("parallel",)),
    )(params, x2d, wx_big, wy_big, cl, cr)

    # Layout plumbing back to NCHW in plain JAX (kernel output stays lane-dense).
    out = (out2d.reshape(RB, 3, Hout, nsteps, TB, Wout)
                 .transpose(3, 0, 4, 1, 2, 5)
                 .reshape(B_pad, 3, Hout, Wout))
    return out[:B]


if __name__ == "__main__":
    key = jax.random.PRNGKey(0)
    kx, kt = jax.random.split(key)

    # Small CIFAR-like batch (padded internally to one lane-dense block).
    x = jax.random.uniform(kx, (2, 3, 16, 16), dtype=jnp.float32)
    y = transformation_forward(x, kt, crop_size=16)
    jax.block_until_ready(y)
    assert y.shape == (2, 3, 16, 16) and y.dtype == jnp.float32
    assert bool(jnp.all(jnp.isfinite(y)))

    # Two lane-dense grid steps (TB=8, RB=1).
    x2 = jax.random.uniform(jax.random.PRNGKey(1), (16, 3, 16, 16), dtype=jnp.float32)
    y2 = transformation_forward(x2, kt, crop_size=16)
    jax.block_until_ready(y2)
    assert y2.shape == (16, 3, 16, 16) and y2.dtype == jnp.float32

    # Exercise the RB > 1 sublane-batched path (RB=4, TB=8, 2 grid steps).
    x3 = jax.random.uniform(jax.random.PRNGKey(2), (64, 3, 16, 16), dtype=jnp.float32)
    y3 = transformation_forward(x3, jax.random.PRNGKey(3), crop_size=16)
    jax.block_until_ready(y3)
    assert y3.shape == (64, 3, 16, 16) and y3.dtype == jnp.float32
    assert bool(jnp.all(jnp.isfinite(y3)))

    print("KERNEL_OK")
</pallas_src>

<mosaic_0001>
module attributes {stable_mosaic.version = 11 : i64} {
  func.func @kernel(%arg0: i32, %arg1: memref<3xf32, #tpu.memory_space<smem>>, %arg2: memref<48x128xbf16, #tpu.memory_space<vmem>>, %arg3: memref<128x128xbf16, #tpu.memory_space<vmem>>, %arg4: memref<48x48xbf16, #tpu.memory_space<vmem>>, %arg5: memref<48x48xbf16, #tpu.memory_space<vmem>>, %arg6: memref<128x128xbf16, #tpu.memory_space<vmem>>, %arg7: memref<48x128xf32, #tpu.memory_space<vmem>>, %arg8: memref<48x128xf32, #tpu.memory_space<vmem>>) attributes {dimension_semantics = [#tpu.dimension_semantics<parallel>], iteration_bounds = array<i64: 1>, scalar_prefetch = 0 : i64, scratch_operands = 1 : i64, tpu.core_type = #tpu.core_type<tc>, window_params = [{transform_indices = @transform_0, window_bounds = array<i64: 3>}, {transform_indices = @transform_1, window_bounds = array<i64: 48, 128>}, {pipeline_mode = #tpu.pipeline_mode<synchronous>, transform_indices = @transform_2, window_bounds = array<i64: 128, 128>}, {pipeline_mode = #tpu.pipeline_mode<synchronous>, transform_indices = @transform_3, window_bounds = array<i64: 48, 48>}, {pipeline_mode = #tpu.pipeline_mode<synchronous>, transform_indices = @transform_4, window_bounds = array<i64: 48, 48>}, {pipeline_mode = #tpu.pipeline_mode<synchronous>, transform_indices = @transform_5, window_bounds = array<i64: 128, 128>}, {transform_indices = @transform_6, window_bounds = array<i64: 48, 128>}]} {
    %c0 = arith.constant 0 : index
    %0 = memref.load %arg1[%c0] : memref<3xf32, #tpu.memory_space<smem>>
    %c1 = arith.constant 1 : index
    %1 = memref.load %arg1[%c1] : memref<3xf32, #tpu.memory_space<smem>>
    %c2 = arith.constant 2 : index
    %2 = memref.load %arg1[%c2] : memref<3xf32, #tpu.memory_space<smem>>
    %c0_0 = arith.constant 0 : index
    %c0_1 = arith.constant 0 : index
    %3 = vector.load %arg2[%c0_0, %c0_1] : memref<48x128xbf16, #tpu.memory_space<vmem>>, vector<48x128xbf16>
    %c0_2 = arith.constant 0 : index
    %c0_3 = arith.constant 0 : index
    %4 = vector.load %arg3[%c0_2, %c0_3] : memref<128x128xbf16, #tpu.memory_space<vmem>>, vector<128x128xbf16>
    %cst = arith.constant dense<0.000000e+00> : vector<48x128xf32>
    %5 = tpu.matmul %3, %4, %cst {dimension_numbers = #tpu.dot_dimension_numbers<[1], [0], [0], [1], [0, 0, 1, 1], [], []>} : vector<48x128xbf16>, vector<128x128xbf16>, vector<48x128xf32> -> vector<48x128xf32>
    %c0_4 = arith.constant 0 : index
    %c0_5 = arith.constant 0 : index
    %6 = vector.load %arg4[%c0_4, %c0_5] : memref<48x48xbf16, #tpu.memory_space<vmem>>, vector<48x48xbf16>
    %7 = arith.truncf %5 : vector<48x128xf32> to vector<48x128xbf16>
    %cst_6 = arith.constant dense<0.000000e+00> : vector<48x128xf32>
    %8 = tpu.matmul %6, %7, %cst_6 {dimension_numbers = #tpu.dot_dimension_numbers<[1], [0], [0], [1], [0, 0, 1, 1], [], []>} : vector<48x48xbf16>, vector<48x128xbf16>, vector<48x128xf32> -> vector<48x128xf32>
    %cst_7 = arith.constant 0.000000e+00 : f32
    %cst_8 = arith.constant 1.000000e+00 : f32
    %9 = vector.broadcast %cst_7 : f32 to vector<48x128xf32>
    %10 = arith.maximumf %9, %8 : vector<48x128xf32>
    %11 = vector.broadcast %cst_8 : f32 to vector<48x128xf32>
    %12 = arith.minimumf %11, %10 : vector<48x128xf32>
    %13 = vector.broadcast %0 : f32 to vector<48x128xf32>
    %14 = arith.mulf %12, %13 : vector<48x128xf32>
    %cst_9 = arith.constant 0.000000e+00 : f32
    %cst_10 = arith.constant 1.000000e+00 : f32
    %15 = vector.broadcast %cst_9 : f32 to vector<48x128xf32>
    %16 = arith.maximumf %15, %14 : vector<48x128xf32>
    %17 = vector.broadcast %cst_10 : f32 to vector<48x128xf32>
    %18 = arith.minimumf %17, %16 : vector<48x128xf32>
    %c0_11 = arith.constant 0 : index
    %c0_12 = arith.constant 0 : index
    %19 = vector.load %arg8[%c0_11, %c0_12] : memref<48x128xf32, #tpu.memory_space<vmem>>, vector<48x128xf32>
    tpu.vector_store %arg8[%c0_11, %c0_12], %18 {strides = array<i32>} : memref<48x128xf32, #tpu.memory_space<vmem>>, vector<48x128xf32>,
    %cst_13 = arith.constant 1.000000e+00 : f32
    %20 = arith.cmpf one, %1, %cst_13 : f32
    %21 = arith.extui %20 : i1 to i32
    %c0_i32 = arith.constant 0 : i32
    %22 = arith.cmpi ne, %21, %c0_i32 : i32
    scf.if %22 {
      %c0_42 = arith.constant 0 : index
      %c0_43 = arith.constant 0 : index
      %79 = vector.load %arg8[%c0_42, %c0_43] : memref<48x128xf32, #tpu.memory_space<vmem>>, vector<48x128xf32>
      %80 = arith.truncf %79 : vector<48x128xf32> to vector<48x128xbf16>
      %c0_44 = arith.constant 0 : index
      %c0_45 = arith.constant 0 : index
      %81 = vector.load %arg5[%c0_44, %c0_45] : memref<48x48xbf16, #tpu.memory_space<vmem>>, vector<48x48xbf16>
      %cst_46 = arith.constant dense<0.000000e+00> : vector<48x128xf32>
      %82 = tpu.matmul %81, %80, %cst_46 {dimension_numbers = #tpu.dot_dimension_numbers<[1], [0], [0], [1], [0, 0, 1, 1], [], []>} : vector<48x48xbf16>, vector<48x128xbf16>, vector<48x128xf32> -> vector<48x128xf32>
      %83 = arith.truncf %82 : vector<48x128xf32> to vector<48x128xbf16>
      %c0_47 = arith.constant 0 : index
      %c0_48 = arith.constant 0 : index
      %84 = vector.load %arg6[%c0_47, %c0_48] : memref<128x128xbf16, #tpu.memory_space<vmem>>, vector<128x128xbf16>
      %cst_49 = arith.constant dense<0.000000e+00> : vector<48x128xf32>
      %85 = tpu.matmul %83, %84, %cst_49 {dimension_numbers = #tpu.dot_dimension_numbers<[1], [0], [0], [1], [0, 0, 1, 1], [], []>} : vector<48x128xbf16>, vector<128x128xbf16>, vector<48x128xf32> -> vector<48x128xf32>
      %86 = vector.broadcast %1 : f32 to vector<48x128xf32>
      %87 = arith.mulf %86, %79 : vector<48x128xf32>
      %cst_50 = arith.constant 1.000000e+00 : f32
      %88 = arith.subf %cst_50, %1 : f32
      %89 = vector.broadcast %88 : f32 to vector<48x128xf32>
      %90 = arith.mulf %89, %85 : vector<48x128xf32>
      %91 = arith.addf %87, %90 : vector<48x128xf32>
      %cst_51 = arith.constant 0.000000e+00 : f32
      %cst_52 = arith.constant 1.000000e+00 : f32
      %92 = vector.broadcast %cst_51 : f32 to vector<48x128xf32>
      %93 = arith.maximumf %92, %91 : vector<48x128xf32>
      %94 = vector.broadcast %cst_52 : f32 to vector<48x128xf32>
      %95 = arith.minimumf %94, %93 : vector<48x128xf32>
      %c0_53 = arith.constant 0 : index
      %c0_54 = arith.constant 0 : index
      %96 = vector.load %arg8[%c0_53, %c0_54] : memref<48x128xf32, #tpu.memory_space<vmem>>, vector<48x128xf32>
      tpu.vector_store %arg8[%c0_53, %c0_54], %95 {strides = array<i32>} : memref<48x128xf32, #tpu.memory_space<vmem>>, vector<48x128xf32>,
    } else {
    }
    %c0_14 = arith.constant 0 : index
    %c0_15 = arith.constant 0 : index
    %23 = vector.load %arg8[%c0_14, %c0_15] : memref<48x128xf32, #tpu.memory_space<vmem>>, vector<16x128xf32>
    %c16 = arith.constant 16 : index
    %c0_16 = arith.constant 0 : index
    %24 = vector.load %arg8[%c16, %c0_16] : memref<48x128xf32, #tpu.memory_space<vmem>>, vector<16x128xf32>
    %c32 = arith.constant 32 : index
    %c0_17 = arith.constant 0 : index
    %25 = vector.load %arg8[%c32, %c0_17] : memref<48x128xf32, #tpu.memory_space<vmem>>, vector<16x128xf32>
    %cst_18 = arith.constant 2.989000e-01 : f32
    %26 = vector.broadcast %cst_18 : f32 to vector<16x128xf32>
    %27 = arith.mulf %26, %23 : vector<16x128xf32>
    %cst_19 = arith.constant 5.870000e-01 : f32
    %28 = vector.broadcast %cst_19 : f32 to vector<16x128xf32>
    %29 = arith.mulf %28, %24 : vector<16x128xf32>
    %30 = arith.addf %27, %29 : vector<16x128xf32>
    %cst_20 = arith.constant 1.140000e-01 : f32
    %31 = vector.broadcast %cst_20 : f32 to vector<16x128xf32>
    %32 = arith.mulf %31, %25 : vector<16x128xf32>
    %33 = arith.addf %30, %32 : vector<16x128xf32>
    %34 = vector.broadcast %2 : f32 to vector<16x128xf32>
    %35 = arith.mulf %34, %23 : vector<16x128xf32>
    %cst_21 = arith.constant 1.000000e+00 : f32
    %36 = arith.subf %cst_21, %2 : f32
    %37 = vector.broadcast %36 : f32 to vector<16x128xf32>
    %38 = arith.mulf %37, %33 : vector<16x128xf32>
    %39 = arith.addf %35, %38 : vector<16x128xf32>
    %cst_22 = arith.constant 0.000000e+00 : f32
    %cst_23 = arith.constant 1.000000e+00 : f32
    %40 = vector.broadcast %cst_22 : f32 to vector<16x128xf32>
    %41 = arith.maximumf %40, %39 : vector<16x128xf32>
    %42 = vector.broadcast %cst_23 : f32 to vector<16x128xf32>
    %43 = arith.minimumf %42, %41 : vector<16x128xf32>
    %cst_24 = arith.constant 4.500000e-01 : f32
    %44 = vector.broadcast %cst_24 : f32 to vector<16x128xf32>
    %45 = arith.subf %43, %44 : vector<16x128xf32>
    %cst_25 = arith.constant 4.44444466 : f32
    %46 = vector.broadcast %cst_25 : f32 to vector<16x128xf32>
    %47 = arith.mulf %45, %46 : vector<16x128xf32>
    %c0_26 = arith.constant 0 : index
    %c0_27 = arith.constant 0 : index
    %48 = vector.load %arg7[%c0_26, %c0_27] : memref<48x128xf32, #tpu.memory_space<vmem>>, vector<16x128xf32>
    tpu.vector_store %arg7[%c0_26, %c0_27], %47 {strides = array<i32>} : memref<48x128xf32, #tpu.memory_space<vmem>>, vector<16x128xf32>,
    %49 = vector.broadcast %2 : f32 to vector<16x128xf32>
    %50 = arith.mulf %49, %24 : vector<16x128xf32>
    %cst_28 = arith.constant 1.000000e+00 : f32
    %51 = arith.subf %cst_28, %2 : f32
    %52 = vector.broadcast %51 : f32 to vector<16x128xf32>
    %53 = arith.mulf %52, %33 : vector<16x128xf32>
    %54 = arith.addf %50, %53 : vector<16x128xf32>
    %cst_29 = arith.constant 0.000000e+00 : f32
    %cst_30 = arith.constant 1.000000e+00 : f32
    %55 = vector.broadcast %cst_29 : f32 to vector<16x128xf32>
    %56 = arith.maximumf %55, %54 : vector<16x128xf32>
    %57 = vector.broadcast %cst_30 : f32 to vector<16x128xf32>
    %58 = arith.minimumf %57, %56 : vector<16x128xf32>
    %cst_31 = arith.constant 4.500000e-01 : f32
    %59 = vector.broadcast %cst_31 : f32 to vector<16x128xf32>
    %60 = arith.subf %58, %59 : vector<16x128xf32>
    %cst_32 = arith.constant 4.44444466 : f32
    %61 = vector.broadcast %cst_32 : f32 to vector<16x128xf32>
    %62 = arith.mulf %60, %61 : vector<16x128xf32>
    %c16_33 = arith.constant 16 : index
    %c0_34 = arith.constant 0 : index
    %63 = vector.load %arg7[%c16_33, %c0_34] : memref<48x128xf32, #tpu.memory_space<vmem>>, vector<16x128xf32>
    tpu.vector_store %arg7[%c16_33, %c0_34], %62 {strides = array<i32>} : memref<48x128xf32, #tpu.memory_space<vmem>>, vector<16x128xf32>,
    %64 = vector.broadcast %2 : f32 to vector<16x128xf32>
    %65 = arith.mulf %64, %25 : vector<16x128xf32>
    %cst_35 = arith.constant 1.000000e+00 : f32
    %66 = arith.subf %cst_35, %2 : f32
    %67 = vector.broadcast %66 : f32 to vector<16x128xf32>
    %68 = arith.mulf %67, %33 : vector<16x128xf32>
    %69 = arith.addf %65, %68 : vector<16x128xf32>
    %cst_36 = arith.constant 0.000000e+00 : f32
    %cst_37 = arith.constant 1.000000e+00 : f32
    %70 = vector.broadcast %cst_36 : f32 to vector<16x128xf32>
    %71 = arith.maximumf %70, %69 : vector<16x128xf32>
    %72 = vector.broadcast %cst_37 : f32 to vector<16x128xf32>
    %73 = arith.minimumf %72, %71 : vector<16x128xf32>
    %cst_38 = arith.constant 4.500000e-01 : f32
    %74 = vector.broadcast %cst_38 : f32 to vector<16x128xf32>
    %75 = arith.subf %73, %74 : vector<16x128xf32>
    %cst_39 = arith.constant 4.44444466 : f32
    %76 = vector.broadcast %cst_39 : f32 to vector<16x128xf32>
    %77 = arith.mulf %75, %76 : vector<16x128xf32>
    %c32_40 = arith.constant 32 : index
    %c0_41 = arith.constant 0 : index
    %78 = vector.load %arg7[%c32_40, %c0_41] : memref<48x128xf32, #tpu.memory_space<vmem>>, vector<16x128xf32>
    tpu.vector_store %arg7[%c32_40, %c0_41], %77 {strides = array<i32>} : memref<48x128xf32, #tpu.memory_space<vmem>>, vector<16x128xf32>,
    return
  }
  func.func @transform_0(%arg0: i32) -> i32 {
    %c0_i32 = arith.constant 0 : i32
    %c0_i32_0 = arith.constant 0 : i32
    return %c0_i32 : i32
  }
  func.func @transform_1(%arg0: i32) -> (i32, i32) {
    %c0_i32 = arith.constant 0 : i32
    %c0_i32_0 = arith.constant 0 : i32
    return %c0_i32, %arg0 : i32, i32
  }
  func.func @transform_2(%arg0: i32) -> (i32, i32) {
    %c0_i32 = arith.constant 0 : i32
    %c0_i32_0 = arith.constant 0 : i32
    %c0_i32_1 = arith.constant 0 : i32
    return %c0_i32, %c0_i32_0 : i32, i32
  }
  func.func @transform_3(%arg0: i32) -> (i32, i32) {
    %c0_i32 = arith.constant 0 : i32
    %c0_i32_0 = arith.constant 0 : i32
    %c0_i32_1 = arith.constant 0 : i32
    return %c0_i32, %c0_i32_0 : i32, i32
  }
  func.func @transform_4(%arg0: i32) -> (i32, i32) {
    %c0_i32 = arith.constant 0 : i32
    %c0_i32_0 = arith.constant 0 : i32
    %c0_i32_1 = arith.constant 0 : i32
    return %c0_i32, %c0_i32_0 : i32, i32
  }
  func.func @transform_5(%arg0: i32) -> (i32, i32) {
    %c0_i32 = arith.constant 0 : i32
    %c0_i32_0 = arith.constant 0 : i32
    %c0_i32_1 = arith.constant 0 : i32
    return %c0_i32, %c0_i32_0 : i32, i32
  }
  func.func @transform_6(%arg0: i32) -> (i32, i32) {
    %c0_i32 = arith.constant 0 : i32
    %c0_i32_0 = arith.constant 0 : i32
    return %c0_i32, %arg0 : i32, i32
  }
}

</mosaic_0001>

<llo_original>
// kernel: tpu_custom_call.1
$region0: #{tpu_custom_call.1}
  #allocation0 [shape = 'u32[]', space=smem, size = 0x4, offset = 0x4, fixed_abs, tag = 'smem constant byte address 0x4 - core index']
  #allocation1 [shape = 'u32[144,128]{1,0:T(1,128)}', space=vmem, size = 0x12000, scoped, tag = 'internal scratch']
  #allocation2 [shape = 'f32[48,128]{1,0:T(8,128)}', space=vmem, size = 0x6000, scoped, tag = 'scratch operand']
  %s0 = inlined_call_operand.hbm [shape: f32[3], index: 0, kind: input, shape index: {}]
  %s1 = inlined_call_operand.hbm [shape: bf16[48,128], index: 1, kind: input, shape index: {}]
  %s2 = inlined_call_operand.hbm [shape: bf16[128,128], index: 2, kind: input, shape index: {}]
  %s3 = inlined_call_operand.hbm [shape: bf16[48,48], index: 3, kind: input, shape index: {}]
  %s4 = inlined_call_operand.hbm [shape: bf16[48,48], index: 4, kind: input, shape index: {}]
  %s5 = inlined_call_operand.hbm [shape: bf16[128,128], index: 5, kind: input, shape index: {}]
  %s6 = inlined_call_operand.hbm [shape: f32[48,128], index: 6, kind: output, shape index: {}]
  %s7 = sld [smem:[#allocation0]]
  $region62: #{tpu_custom_call.1} parent=0
    _
  %s9 = ssub.s32 1, %s7
  %s10 = scalar_select 0, %s9, %s7
  $region1: #{tpu_custom_call.1} parent=0
    #allocation3 [shape = 'u8[512]{0}', space=smem, size = 0x200, scoped, tag = 'input window, operand 0, single buffered']
    #allocation4 [shape = 's32[1]{0}', space=sflag, size = 0x4, scoped, tag = 'scoped memory for tpu_custom_call.1']
    #allocation5 [shape = 's32[1]{0}', space=sflag, size = 0x4, scoped, tag = 'scoped memory for tpu_custom_call.1']
    #allocation6 [shape = 's32[1]{0}', space=sflag, size = 0x4, scoped, tag = 'scoped memory for tpu_custom_call.1']
    #allocation7 [shape = 'u8[12288]{0}', space=vmem, size = 0x3000, scoped, tag = 'input window, operand 1, single buffered']
    #allocation8 [shape = 'u8[32768]{0}', space=vmem, size = 0x8000, scoped, tag = 'input window, operand 2, single buffered']
    #allocation9 [shape = 's32[1]{0}', space=sflag, size = 0x4, scoped, tag = 'scoped memory for tpu_custom_call.1']
    #allocation10 [shape = 'u8[12288]{0}', space=vmem, size = 0x3000, scoped, tag = 'input window, operand 3, single buffered']
    #allocation11 [shape = 'u8[12288]{0}', space=vmem, size = 0x3000, scoped, tag = 'input window, operand 4, single buffered']
    #allocation12 [shape = 's32[1]{0}', space=sflag, size = 0x4, scoped, tag = 'scoped memory for tpu_custom_call.1']
    #allocation13 [shape = 'u8[32768]{0}', space=vmem, size = 0x8000, scoped, tag = 'input window, operand 5, single buffered']
    #allocation14 [shape = 'u8[24576]{0}', space=vmem, size = 0x6000, scoped, tag = 'output window, operand 0, single buffered']
    %11 = vsyncpa [#allocation6], 0
    %12 = vsyncpa [#allocation4], 0
    %13 = vsyncpa [#allocation9], 0
    %14 = vsyncpa [#allocation12], 0
    %15 = vsyncpa [#allocation5], 0
    // Predicated region
    $region2: #{tpu_custom_call.1} parent=1 // pred_check
      _
    $region3: #{tpu_custom_call.1} parent=1 // pred_check_branch
      %17 = sbr.rel (0) target = $region5
    $region4: #{tpu_custom_call.1} parent=1 // pred_region
      %s19 = ssub.s32 16, 16
      %20 = vsyncadd [#allocation6], %s19
      %23 = dma.hbm_to_smem %s0, 16, [#allocation3], [#allocation6]
    $region5: #{tpu_custom_call.1} parent=1 // pred_fallthru
      _
    // Predicated region
    $region6: #{tpu_custom_call.1} parent=1 // pred_check
      _
    $region7: #{tpu_custom_call.1} parent=1 // pred_check_branch
      %25 = sbr.rel (0) target = $region9
    $region8: #{tpu_custom_call.1} parent=1 // pred_region
      %s27 = ssub.s32 384, 384
      %28 = vsyncadd [#allocation4], %s27
      %s29 = sshll.u32 [#allocation7], 4
      %s30 = int_to_ptr.vmem [resolvable:$true] %s29
      %35 = dma.hbm_to_vmem [thread:$0]  %s1, 384, %s30, [#allocation4], 64, 64, 4
    $region9: #{tpu_custom_call.1} parent=1 // pred_fallthru
      _
    // Predicated region
    $region10: #{tpu_custom_call.1} parent=1 // pred_check
      _
    $region11: #{tpu_custom_call.1} parent=1 // pred_check_branch
      %37 = sbr.rel (0) target = $region13
    $region12: #{tpu_custom_call.1} parent=1 // pred_region
      %s39 = ssub.s32 1024, 1024
      %40 = vsyncadd [#allocation9], %s39
      %s41 = sshll.u32 [#allocation8], 4
      %s42 = int_to_ptr.vmem [resolvable:$true] %s41
      %47 = dma.hbm_to_vmem [thread:$0]  %s2, 1024, %s42, [#allocation9], 64, 64, 4
    $region13: #{tpu_custom_call.1} parent=1 // pred_fallthru
      _
    // Predicated region
    $region14: #{tpu_custom_call.1} parent=1 // pred_check
      _
    $region15: #{tpu_custom_call.1} parent=1 // pred_check_branch
      %49 = sbr.rel (0) target = $region17
    $region16: #{tpu_custom_call.1} parent=1 // pred_region
      %s51 = ssub.s32 384, 384
      %52 = vsyncadd [#allocation9], %s51
      %s53 = sshll.u32 [#allocation10], 4
      %s54 = int_to_ptr.vmem [resolvable:$true] %s53
      %59 = dma.hbm_to_vmem [thread:$0]  %s3, 384, %s54, [#allocation9], 64, 64, 4
    $region17: #{tpu_custom_call.1} parent=1 // pred_fallthru
      _
    // Predicated region
    $region18: #{tpu_custom_call.1} parent=1 // pred_check
      _
    $region19: #{tpu_custom_call.1} parent=1 // pred_check_branch
      %61 = sbr.rel (0) target = $region21
    $region20: #{tpu_custom_call.1} parent=1 // pred_region
      %s63 = ssub.s32 384, 384
      %64 = vsyncadd [#allocation12], %s63
      %s65 = sshll.u32 [#allocation11], 4
      %s66 = int_to_ptr.vmem [resolvable:$true] %s65
      %71 = dma.hbm_to_vmem [thread:$0]  %s4, 384, %s66, [#allocation12], 64, 64, 4
    $region21: #{tpu_custom_call.1} parent=1 // pred_fallthru
      _
    // Predicated region
    $region22: #{tpu_custom_call.1} parent=1 // pred_check
      _
    $region23: #{tpu_custom_call.1} parent=1 // pred_check_branch
      %73 = sbr.rel (0) target = $region25
    $region24: #{tpu_custom_call.1} parent=1 // pred_region
      %s75 = ssub.s32 1024, 1024
      %76 = vsyncadd [#allocation12], %s75
      %s77 = sshll.u32 [#allocation13], 4
      %s78 = int_to_ptr.vmem [resolvable:$true] %s77
      %83 = dma.hbm_to_vmem [thread:$0]  %s5, 1024, %s78, [#allocation12], 64, 64, 4
    $region25: #{tpu_custom_call.1} parent=1 // pred_fallthru
      _
    // Predicated region
    $region26: #{tpu_custom_call.1} parent=1 // pred_check
      _
    $region27: #{tpu_custom_call.1} parent=1 // pred_check_branch
      %85 = sbr.rel (0) target = $region29
    $region28: #{tpu_custom_call.1} parent=1 // pred_region
      %86 = dma.done [#allocation6], 16
    $region29: #{tpu_custom_call.1} parent=1 // pred_fallthru
      _
    // Predicated region
    $region30: #{tpu_custom_call.1} parent=1 // pred_check
      _
    $region31: #{tpu_custom_call.1} parent=1 // pred_check_branch
      %88 = sbr.rel (0) target = $region33
    $region32: #{tpu_custom_call.1} parent=1 // pred_region
      %89 = dma.done [#allocation4], 384
    $region33: #{tpu_custom_call.1} parent=1 // pred_fallthru
      _
    // Predicated region
    $region34: #{tpu_custom_call.1} parent=1 // pred_check
      _
    $region35: #{tpu_custom_call.1} parent=1 // pred_check_branch
      %91 = sbr.rel (0) target = $region37
    $region36: #{tpu_custom_call.1} parent=1 // pred_region
      %92 = dma.done [#allocation9], 1024
    $region37: #{tpu_custom_call.1} parent=1 // pred_fallthru
      _
    // Predicated region
    $region38: #{tpu_custom_call.1} parent=1 // pred_check
      _
    $region39: #{tpu_custom_call.1} parent=1 // pred_check_branch
      %94 = sbr.rel (0) target = $region41
    $region40: #{tpu_custom_call.1} parent=1 // pred_region
      %95 = dma.done [#allocation9], 384
    $region41: #{tpu_custom_call.1} parent=1 // pred_fallthru
      _
    // Predicated region
    $region42: #{tpu_custom_call.1} parent=1 // pred_check
      _
    $region43: #{tpu_custom_call.1} parent=1 // pred_check_branch
      %97 = sbr.rel (0) target = $region45
    $region44: #{tpu_custom_call.1} parent=1 // pred_region
      %98 = dma.done [#allocation12], 384
    $region45: #{tpu_custom_call.1} parent=1 // pred_fallthru
      _
    // Predicated region
    $region46: #{tpu_custom_call.1} parent=1 // pred_check
      _
    $region47: #{tpu_custom_call.1} parent=1 // pred_check_branch
      %100 = sbr.rel (0) target = $region49
    $region48: #{tpu_custom_call.1} parent=1 // pred_region
      %101 = dma.done [#allocation12], 1024
    $region49: #{tpu_custom_call.1} parent=1 // pred_fallthru
      _
    %102 = sfence
    %s104 = sld [smem:[#allocation3]]
    %s105 = sld [smem:[#allocation3 + $0x1]]
    %s106 = sld [smem:[#allocation3 + $0x2]]
    %v107 = vld [vmem:[#allocation7] sm:$0xf]
    %v108 = vld [vmem:[#allocation7 + $0x4] sm:$0xf]
    %v109 = vld [vmem:[#allocation7 + $0x8] sm:$0xf]
    %v110 = vld [vmem:[#allocation7 + $0xc] sm:$0xf]
    %v111 = vld [vmem:[#allocation7 + $0x10] sm:$0xf]
    %v112 = vld [vmem:[#allocation7 + $0x14] sm:$0xf]
    %v113 = vld [vmem:[#allocation8] sm:$0xf]
    %v114 = vld [vmem:[#allocation8 + $0x4] sm:$0xf]
    %v115 = vld [vmem:[#allocation8 + $0x8] sm:$0xf]
    %v116 = vld [vmem:[#allocation8 + $0xc] sm:$0xf]
    %v117 = vld [vmem:[#allocation8 + $0x10] sm:$0xf]
    %v118 = vld [vmem:[#allocation8 + $0x14] sm:$0xf]
    %v119 = vld [vmem:[#allocation8 + $0x18] sm:$0xf]
    %v120 = vld [vmem:[#allocation8 + $0x1c] sm:$0xf]
    %v121 = vld [vmem:[#allocation8 + $0x20] sm:$0xf]
    %v122 = vld [vmem:[#allocation8 + $0x24] sm:$0xf]
    %v123 = vld [vmem:[#allocation8 + $0x28] sm:$0xf]
    %v124 = vld [vmem:[#allocation8 + $0x2c] sm:$0xf]
    %v125 = vld [vmem:[#allocation8 + $0x30] sm:$0xf]
    %v126 = vld [vmem:[#allocation8 + $0x34] sm:$0xf]
    %v127 = vld [vmem:[#allocation8 + $0x38] sm:$0xf]
    %v128 = vld [vmem:[#allocation8 + $0x3c] sm:$0xf]
    %v135 = vunpack.c.l.b16 %v107
    %v136 = vunpack.c.l.b16 %v108
    %v137 = vunpack.c.l.b16 %v109
    %v138 = vunpack.c.l.b16 %v110
    %v139 = vunpack.c.l.b16 %v111
    %v140 = vunpack.c.l.b16 %v112
    %v141 = vpack.c.b16 %v136, %v135
    %v142 = vpack.c.b16 %v138, %v137
    %v143 = vpack.c.b16 %v140, %v139
    %v163 = vunpack.c.l.b16 %v113
    %v164 = vunpack.c.l.b16 %v114
    %v165 = vunpack.c.l.b16 %v115
    %v166 = vunpack.c.l.b16 %v116
    %v167 = vunpack.c.l.b16 %v117
    %v168 = vunpack.c.l.b16 %v118
    %v169 = vunpack.c.l.b16 %v119
    %v170 = vunpack.c.l.b16 %v120
    %v171 = vunpack.c.l.b16 %v121
    %v172 = vunpack.c.l.b16 %v122
    %v173 = vunpack.c.l.b16 %v123
    %v174 = vunpack.c.l.b16 %v124
    %v175 = vunpack.c.l.b16 %v125
    %v176 = vunpack.c.l.b16 %v126
    %v177 = vunpack.c.l.b16 %v127
    %v178 = vunpack.c.l.b16 %v128
    %v179 = vpack.c.b16 %v164, %v163
    %v180 = vpack.c.b16 %v166, %v165
    %v181 = vpack.c.b16 %v168, %v167
    %v182 = vpack.c.b16 %v170, %v169
    %v183 = vpack.c.b16 %v172, %v171
    %v184 = vpack.c.b16 %v174, %v173
    %v185 = vpack.c.b16 %v176, %v175
    %v186 = vpack.c.b16 %v178, %v177
    %195 = vmatprep.subr.bf16.mxu0 0
    %196 = vmatpush1.bf16.msra.mxu0 %v179
    %197 = vmatprep.subr.bf16.mxu0 0
    %198 = vmatpush1.bf16.msra.mxu0 %v180
    %199 = vmatprep.subr.bf16.mxu0 0
    %200 = vmatpush1.bf16.msra.mxu0 %v181
    %201 = vmatprep.subr.bf16.mxu0 0
    %202 = vmatpush1.bf16.msra.mxu0 %v182
    %203 = vmatprep.subr.bf16.mxu0 0
    %204 = vmatpush1.bf16.msra.mxu0 %v183
    %205 = vmatprep.subr.bf16.mxu0 0
    %206 = vmatpush1.bf16.msra.mxu0 %v184
    %207 = vmatprep.subr.bf16.mxu0 0
    %208 = vmatpush1.bf16.msra.mxu0 %v185
    %209 = vmatprep.subr.bf16.mxu0 0
    %210 = vmatpush1.bf16.msra.mxu0 %v186
    %211 = vmatprep.subr.bf16.mxu0 0
    %212 = vmatpush1.bf16.msra.mxu0 0
    %213 = vmatprep.subr.bf16.mxu0 0
    %214 = vmatpush1.bf16.msra.mxu0 0
    %215 = vmatprep.subr.bf16.mxu0 0
    %216 = vmatpush1.bf16.msra.mxu0 0
    %217 = vmatprep.subr.bf16.mxu0 0
    %218 = vmatpush1.bf16.msra.mxu0 0
    %219 = vmatprep.subr.bf16.mxu0 0
    %220 = vmatpush1.bf16.msra.mxu0 0
    %221 = vmatprep.subr.bf16.mxu0 0
    %222 = vmatpush1.bf16.msra.mxu0 0
    %223 = vmatprep.subr.bf16.mxu0 0
    %224 = vmatpush1.bf16.msra.mxu0 0
    %225 = vmatprep.subr.bf16.mxu0 0
    %226 = vmatpush1.bf16.msra.mxu0 0
    %227 = vmatprep.mubr.bf16.mxu0 0
    %228 = vmatmul.mubr.bf16.gmra.mrb[0].mxu0 %v141
    %v229 = vpop.f32.mrb[0].mxu0
    %v230 = vadd.f32 0.0, %v229
    %v231 = vpop.f32.mrb[0].mxu0
    %v232 = vpop.f32.mrb[0].mxu0
    %v233 = vadd.f32 0.0, %v232
    %v234 = vpop.f32.mrb[0].mxu0
    %235 = vmatprep.mubr.bf16.mxu0 0
    %236 = vmatmul.mubr.bf16.gmra.mrb[0].mxu0 %v142
    %v237 = vpop.f32.mrb[0].mxu0
    %v238 = vadd.f32 0.0, %v237
    %v239 = vpop.f32.mrb[0].mxu0
    %v240 = vpop.f32.mrb[0].mxu0
    %v241 = vadd.f32 0.0, %v240
    %v242 = vpop.f32.mrb[0].mxu0
    %243 = vmatprep.mubr.bf16.mxu0 0
    %244 = vmatmul.mubr.bf16.gmra.mrb[0].mxu0 %v143
    %v245 = vpop.f32.mrb[0].mxu0
    %v246 = vadd.f32 0.0, %v245
    %v247 = vpop.f32.mrb[0].mxu0
    %v248 = vpop.f32.mrb[0].mxu0
    %v249 = vadd.f32 0.0, %v248
    %v250 = vpop.f32.mrb[0].mxu0
    %251 = vdwg.mxu0
    %v252 = vld [vmem:[#allocation10] sm:$0xf]
    %v253 = vld [vmem:[#allocation10 + $0x4] sm:$0xf]
    %v254 = vld [vmem:[#allocation10 + $0x8] sm:$0xf]
    %v255 = vld [vmem:[#allocation10 + $0xc] sm:$0xf]
    %v256 = vld [vmem:[#allocation10 + $0x10] sm:$0xf]
    %v257 = vld [vmem:[#allocation10 + $0x14] sm:$0xf]
    %v258 = vpack.c.bf16 %v233, %v230
    %v259 = vpack.c.bf16 %v241, %v238
    %v260 = vpack.c.bf16 %v249, %v246
    %v267 = vunpack.c.l.b16 %v252
    %v268 = vunpack.c.l.b16 %v253
    %v269 = vunpack.c.l.b16 %v254
    %v270 = vunpack.c.l.b16 %v255
    %v271 = vunpack.c.l.b16 %v256
    %v272 = vunpack.c.l.b16 %v257
    %v273 = vpack.c.b16 %v268, %v267
    %v274 = vpack.c.b16 %v270, %v269
    %v275 = vpack.c.b16 %v272, %v271
    %vm276 = vcmask 392192
    %v278 = vsel %vm276, %v273, 0
    %v281 = vsel %vm276, %v274, 0
    %v284 = vsel %vm276, %v275, 0
    %286 = vmatprep.subr.bf16.mxu0 0
    %287 = vmatpush1.bf16.msra.mxu0 %v258
    %288 = vmatprep.subr.bf16.mxu0 0
    %289 = vmatpush1.bf16.msra.mxu0 %v259
    %290 = vmatprep.subr.bf16.mxu0 0
    %291 = vmatpush1.bf16.msra.mxu0 %v260
    %292 = vmatprep.subr.bf16.mxu0 0
    %293 = vmatpush1.bf16.msra.mxu0 0
    %294 = vmatprep.subr.bf16.mxu0 0
    %295 = vmatpush1.bf16.msra.mxu0 0
    %296 = vmatprep.subr.bf16.mxu0 0
    %297 = vmatpush1.bf16.msra.mxu0 0
    %298 = vmatprep.subr.bf16.mxu0 0
    %299 = vmatpush1.bf16.msra.mxu0 0
    %300 = vmatprep.subr.bf16.mxu0 0
    %301 = vmatpush1.bf16.msra.mxu0 0
    %302 = vmatprep.subr.bf16.mxu0 0
    %303 = vmatpush1.bf16.msra.mxu0 0
    %304 = vmatprep.subr.bf16.mxu0 0
    %305 = vmatpush1.bf16.msra.mxu0 0
    %306 = vmatprep.subr.bf16.mxu0 0
    %307 = vmatpush1.bf16.msra.mxu0 0
    %308 = vmatprep.subr.bf16.mxu0 0
    %309 = vmatpush1.bf16.msra.mxu0 0
    %310 = vmatprep.subr.bf16.mxu0 0
    %311 = vmatpush1.bf16.msra.mxu0 0
    %312 = vmatprep.subr.bf16.mxu0 0
    %313 = vmatpush1.bf16.msra.mxu0 0
    %314 = vmatprep.subr.bf16.mxu0 0
    %315 = vmatpush1.bf16.msra.mxu0 0
    %316 = vmatprep.subr.bf16.mxu0 0
    %317 = vmatpush1.bf16.msra.mxu0 0
    %318 = vmatprep.mubr.bf16.mxu0 0
    %319 = vmatmul.mubr.bf16.gmra.mrb[0].mxu0 %v278
    %v320 = vpop.f32.mrb[0].mxu0
    %v321 = vadd.f32 0.0, %v320
    %v322 = vpop.f32.mrb[0].mxu0
    %v323 = vpop.f32.mrb[0].mxu0
    %v324 = vadd.f32 0.0, %v323
    %v325 = vpop.f32.mrb[0].mxu0
    %326 = vmatprep.mubr.bf16.mxu0 0
    %327 = vmatmul.mubr.bf16.gmra.mrb[0].mxu0 %v281
    %v328 = vpop.f32.mrb[0].mxu0
    %v329 = vadd.f32 0.0, %v328
    %v330 = vpop.f32.mrb[0].mxu0
    %v331 = vpop.f32.mrb[0].mxu0
    %v332 = vadd.f32 0.0, %v331
    %v333 = vpop.f32.mrb[0].mxu0
    %334 = vmatprep.mubr.bf16.mxu0 0
    %335 = vmatmul.mubr.bf16.gmra.mrb[0].mxu0 %v284
    %v336 = vpop.f32.mrb[0].mxu0
    %v337 = vadd.f32 0.0, %v336
    %v338 = vpop.f32.mrb[0].mxu0
    %v339 = vpop.f32.mrb[0].mxu0
    %v340 = vadd.f32 0.0, %v339
    %v341 = vpop.f32.mrb[0].mxu0
    %342 = vdwg.mxu0
    %v343 = vmax.f32 %v321, 0.0
    %v344 = vmax.f32 %v324, 0.0
    %v345 = vmax.f32 %v329, 0.0
    %v346 = vmax.f32 %v332, 0.0
    %v347 = vmax.f32 %v337, 0.0
    %v348 = vmax.f32 %v340, 0.0
    %v349 = vmin.f32 %v343, 1.0
    %v350 = vmin.f32 %v344, 1.0
    %v351 = vmin.f32 %v345, 1.0
    %v352 = vmin.f32 %v346, 1.0
    %v353 = vmin.f32 %v347, 1.0
    %v354 = vmin.f32 %v348, 1.0
    %v355 = vstv %s104
    %v356 = vmul.f32 %v349, %v355
    %v357 = vmul.f32 %v350, %v355
    %v358 = vmul.f32 %v351, %v355
    %v359 = vmul.f32 %v352, %v355
    %v360 = vmul.f32 %v353, %v355
    %v361 = vmul.f32 %v354, %v355
    %v362 = vmax.f32 %v356, 0.0
    %v363 = vmax.f32 %v357, 0.0
    %v364 = vmax.f32 %v358, 0.0
    %v365 = vmax.f32 %v359, 0.0
    %v366 = vmax.f32 %v360, 0.0
    %v367 = vmax.f32 %v361, 0.0
    %v368 = vmin.f32 %v362, 1.0
    %v369 = vmin.f32 %v363, 1.0
    %v370 = vmin.f32 %v364, 1.0
    %v371 = vmin.f32 %v365, 1.0
    %v372 = vmin.f32 %v366, 1.0
    %v373 = vmin.f32 %v367, 1.0
    %374 = vst [vmem:[#allocation2] sm:$0xff] %v368
    %375 = vst [vmem:[#allocation2 + $0x8] sm:$0xff] %v369
    %376 = vst [vmem:[#allocation2 + $0x10] sm:$0xff] %v370
    %377 = vst [vmem:[#allocation2 + $0x18] sm:$0xff] %v371
    %378 = vst [vmem:[#allocation2 + $0x20] sm:$0xff] %v372
    %379 = vst [vmem:[#allocation2 + $0x28] sm:$0xff] %v373
    %p380 = scmp.ne.f32.partialorder %s105, 1.0
    // Predicated region
    $region50: #{tpu_custom_call.1} parent=1 // pred_check
      %p381 = pneg %p380
    $region51: #{tpu_custom_call.1} parent=1 // pred_check_branch
      %383 = sbr.rel (%p381) target = $region53
    $region52: #{tpu_custom_call.1} parent=1 // pred_region
      %v384 = vld [vmem:[#allocation2] sm:$0xff]
      %v385 = vld [vmem:[#allocation2 + $0x8] sm:$0xff]
      %v386 = vld [vmem:[#allocation2 + $0x10] sm:$0xff]
      %v387 = vld [vmem:[#allocation2 + $0x18] sm:$0xff]
      %v388 = vld [vmem:[#allocation2 + $0x20] sm:$0xff]
      %v389 = vld [vmem:[#allocation2 + $0x28] sm:$0xff]
      %v390 = vpack.c.bf16 %v385, %v384
      %v391 = vpack.c.bf16 %v387, %v386
      %v392 = vpack.c.bf16 %v389, %v388
      %v393 = vld [vmem:[#allocation11] sm:$0xf]
      %v394 = vld [vmem:[#allocation11 + $0x4] sm:$0xf]
      %v395 = vld [vmem:[#allocation11 + $0x8] sm:$0xf]
      %v396 = vld [vmem:[#allocation11 + $0xc] sm:$0xf]
      %v397 = vld [vmem:[#allocation11 + $0x10] sm:$0xf]
      %v398 = vld [vmem:[#allocation11 + $0x14] sm:$0xf]
      %v405 = vunpack.c.l.b16 %v393
      %v406 = vunpack.c.l.b16 %v394
      %v407 = vunpack.c.l.b16 %v395
      %v408 = vunpack.c.l.b16 %v396
      %v409 = vunpack.c.l.b16 %v397
      %v410 = vunpack.c.l.b16 %v398
      %v411 = vpack.c.b16 %v406, %v405
      %v412 = vpack.c.b16 %v408, %v407
      %v413 = vpack.c.b16 %v410, %v409
      %v415 = vsel %vm276, %v411, 0
      %v418 = vsel %vm276, %v412, 0
      %v421 = vsel %vm276, %v413, 0
      %423 = vmatprep.subr.bf16.mxu0 0
      %424 = vmatpush1.bf16.msra.mxu0 %v390
      %425 = vmatprep.subr.bf16.mxu0 0
      %426 = vmatpush1.bf16.msra.mxu0 %v391
      %427 = vmatprep.subr.bf16.mxu0 0
      %428 = vmatpush1.bf16.msra.mxu0 %v392
      %429 = vmatprep.subr.bf16.mxu0 0
      %430 = vmatpush1.bf16.msra.mxu0 0
      %431 = vmatprep.subr.bf16.mxu0 0
      %432 = vmatpush1.bf16.msra.mxu0 0
      %433 = vmatprep.subr.bf16.mxu0 0
      %434 = vmatpush1.bf16.msra.mxu0 0
      %435 = vmatprep.subr.bf16.mxu0 0
      %436 = vmatpush1.bf16.msra.mxu0 0
      %437 = vmatprep.subr.bf16.mxu0 0
      %438 = vmatpush1.bf16.msra.mxu0 0
      %439 = vmatprep.subr.bf16.mxu0 0
      %440 = vmatpush1.bf16.msra.mxu0 0
      %441 = vmatprep.subr.bf16.mxu0 0
      %442 = vmatpush1.bf16.msra.mxu0 0
      %443 = vmatprep.subr.bf16.mxu0 0
      %444 = vmatpush1.bf16.msra.mxu0 0
      %445 = vmatprep.subr.bf16.mxu0 0
      %446 = vmatpush1.bf16.msra.mxu0 0
      %447 = vmatprep.subr.bf16.mxu0 0
      %448 = vmatpush1.bf16.msra.mxu0 0
      %449 = vmatprep.subr.bf16.mxu0 0
      %450 = vmatpush1.bf16.msra.mxu0 0
      %451 = vmatprep.subr.bf16.mxu0 0
      %452 = vmatpush1.bf16.msra.mxu0 0
      %453 = vmatprep.subr.bf16.mxu0 0
      %454 = vmatpush1.bf16.msra.mxu0 0
      %455 = vmatprep.mubr.bf16.mxu0 0
      %456 = vmatmul.mubr.bf16.gmra.mrb[0].mxu0 %v415
      %v457 = vpop.f32.mrb[0].mxu0
      %v458 = vadd.f32 0.0, %v457
      %v459 = vpop.f32.mrb[0].mxu0
      %v460 = vpop.f32.mrb[0].mxu0
      %v461 = vadd.f32 0.0, %v460
      %v462 = vpop.f32.mrb[0].mxu0
      %463 = vmatprep.mubr.bf16.mxu0 0
      %464 = vmatmul.mubr.bf16.gmra.mrb[0].mxu0 %v418
      %v465 = vpop.f32.mrb[0].mxu0
      %v466 = vadd.f32 0.0, %v465
      %v467 = vpop.f32.mrb[0].mxu0
      %v468 = vpop.f32.mrb[0].mxu0
      %v469 = vadd.f32 0.0, %v468
      %v470 = vpop.f32.mrb[0].mxu0
      %471 = vmatprep.mubr.bf16.mxu0 0
      %472 = vmatmul.mubr.bf16.gmra.mrb[0].mxu0 %v421
      %v473 = vpop.f32.mrb[0].mxu0
      %v474 = vadd.f32 0.0, %v473
      %v475 = vpop.f32.mrb[0].mxu0
      %v476 = vpop.f32.mrb[0].mxu0
      %v477 = vadd.f32 0.0, %v476
      %v478 = vpop.f32.mrb[0].mxu0
      %479 = vdwg.mxu0
      %v480 = vpack.c.bf16 %v461, %v458
      %v481 = vpack.c.bf16 %v469, %v466
      %v482 = vpack.c.bf16 %v477, %v474
      %v483 = vld [vmem:[#allocation13] sm:$0xf]
      %v484 = vld [vmem:[#allocation13 + $0x4] sm:$0xf]
      %v485 = vld [vmem:[#allocation13 + $0x8] sm:$0xf]
      %v486 = vld [vmem:[#allocation13 + $0xc] sm:$0xf]
      %v487 = vld [vmem:[#allocation13 + $0x10] sm:$0xf]
      %v488 = vld [vmem:[#allocation13 + $0x14] sm:$0xf]
      %v489 = vld [vmem:[#allocation13 + $0x18] sm:$0xf]
      %v490 = vld [vmem:[#allocation13 + $0x1c] sm:$0xf]
      %v491 = vld [vmem:[#allocation13 + $0x20] sm:$0xf]
      %v492 = vld [vmem:[#allocation13 + $0x24] sm:$0xf]
      %v493 = vld [vmem:[#allocation13 + $0x28] sm:$0xf]
      %v494 = vld [vmem:[#allocation13 + $0x2c] sm:$0xf]
      %v495 = vld [vmem:[#allocation13 + $0x30] sm:$0xf]
      %v496 = vld [vmem:[#allocation13 + $0x34] sm:$0xf]
      %v497 = vld [vmem:[#allocation13 + $0x38] sm:$0xf]
      %v498 = vld [vmem:[#allocation13 + $0x3c] sm:$0xf]
      %v515 = vunpack.c.l.b16 %v483
      %v516 = vunpack.c.l.b16 %v484
      %v517 = vunpack.c.l.b16 %v485
      %v518 = vunpack.c.l.b16 %v486
      %v519 = vunpack.c.l.b16 %v487
      %v520 = vunpack.c.l.b16 %v488
      %v521 = vunpack.c.l.b16 %v489
      %v522 = vunpack.c.l.b16 %v490
      %v523 = vunpack.c.l.b16 %v491
      %v524 = vunpack.c.l.b16 %v492
      %v525 = vunpack.c.l.b16 %v493
      %v526 = vunpack.c.l.b16 %v494
      %v527 = vunpack.c.l.b16 %v495
      %v528 = vunpack.c.l.b16 %v496
      %v529 = vunpack.c.l.b16 %v497
      %v530 = vunpack.c.l.b16 %v498
      %v531 = vpack.c.b16 %v516, %v515
      %v532 = vpack.c.b16 %v518, %v517
      %v533 = vpack.c.b16 %v520, %v519
      %v534 = vpack.c.b16 %v522, %v521
      %v535 = vpack.c.b16 %v524, %v523
      %v536 = vpack.c.b16 %v526, %v525
      %v537 = vpack.c.b16 %v528, %v527
      %v538 = vpack.c.b16 %v530, %v529
      %547 = vmatprep.subr.bf16.mxu0 0
      %548 = vmatpush1.bf16.msra.mxu0 %v531
      %549 = vmatprep.subr.bf16.mxu0 0
      %550 = vmatpush1.bf16.msra.mxu0 %v532
      %551 = vmatprep.subr.bf16.mxu0 0
      %552 = vmatpush1.bf16.msra.mxu0 %v533
      %553 = vmatprep.subr.bf16.mxu0 0
      %554 = vmatpush1.bf16.msra.mxu0 %v534
      %555 = vmatprep.subr.bf16.mxu0 0
      %556 = vmatpush1.bf16.msra.mxu0 %v535
      %557 = vmatprep.subr.bf16.mxu0 0
      %558 = vmatpush1.bf16.msra.mxu0 %v536
      %559 = vmatprep.subr.bf16.mxu0 0
      %560 = vmatpush1.bf16.msra.mxu0 %v537
      %561 = vmatprep.subr.bf16.mxu0 0
      %562 = vmatpush1.bf16.msra.mxu0 %v538
      %563 = vmatprep.subr.bf16.mxu0 0
      %564 = vmatpush1.bf16.msra.mxu0 0
      %565 = vmatprep.subr.bf16.mxu0 0
      %566 = vmatpush1.bf16.msra.mxu0 0
      %567 = vmatprep.subr.bf16.mxu0 0
      %568 = vmatpush1.bf16.msra.mxu0 0
      %569 = vmatprep.subr.bf16.mxu0 0
      %570 = vmatpush1.bf16.msra.mxu0 0
      %571 = vmatprep.subr.bf16.mxu0 0
      %572 = vmatpush1.bf16.msra.mxu0 0
      %573 = vmatprep.subr.bf16.mxu0 0
      %574 = vmatpush1.bf16.msra.mxu0 0
      %575 = vmatprep.subr.bf16.mxu0 0
      %576 = vmatpush1.bf16.msra.mxu0 0
      %577 = vmatprep.subr.bf16.mxu0 0
      %578 = vmatpush1.bf16.msra.mxu0 0
      %579 = vmatprep.mubr.bf16.mxu0 0
      %580 = vmatmul.mubr.bf16.gmra.mrb[0].mxu0 %v480
      %v581 = vpop.f32.mrb[0].mxu0
      %v582 = vadd.f32 0.0, %v581
      %v583 = vpop.f32.mrb[0].mxu0
      %v584 = vpop.f32.mrb[0].mxu0
      %v585 = vadd.f32 0.0, %v584
      %v586 = vpop.f32.mrb[0].mxu0
      %587 = vmatprep.mubr.bf16.mxu0 0
      %588 = vmatmul.mubr.bf16.gmra.mrb[0].mxu0 %v481
      %v589 = vpop.f32.mrb[0].mxu0
      %v590 = vadd.f32 0.0, %v589
      %v591 = vpop.f32.mrb[0].mxu0
      %v592 = vpop.f32.mrb[0].mxu0
      %v593 = vadd.f32 0.0, %v592
      %v594 = vpop.f32.mrb[0].mxu0
      %595 = vmatprep.mubr.bf16.mxu0 0
      %596 = vmatmul.mubr.bf16.gmra.mrb[0].mxu0 %v482
      %v597 = vpop.f32.mrb[0].mxu0
      %v598 = vadd.f32 0.0, %v597
      %v599 = vpop.f32.mrb[0].mxu0
      %v600 = vpop.f32.mrb[0].mxu0
      %v601 = vadd.f32 0.0, %v600
      %v602 = vpop.f32.mrb[0].mxu0
      %603 = vdwg.mxu0
      %v604 = vstv %s105
      %v605 = vmul.f32 %v604, %v384
      %v606 = vmul.f32 %v604, %v385
      %v607 = vmul.f32 %v604, %v386
      %v608 = vmul.f32 %v604, %v387
      %v609 = vmul.f32 %v604, %v388
      %v610 = vmul.f32 %v604, %v389
      %s611 = ssub.f32 1.0, %s105
      %v612 = vstv %s611
      %v613 = vmul.f32 %v612, %v582
      %v614 = vmul.f32 %v612, %v585
      %v615 = vmul.f32 %v612, %v590
      %v616 = vmul.f32 %v612, %v593
      %v617 = vmul.f32 %v612, %v598
      %v618 = vmul.f32 %v612, %v601
      %v619 = vadd.f32 %v605, %v613
      %v620 = vadd.f32 %v606, %v614
      %v621 = vadd.f32 %v607, %v615
      %v622 = vadd.f32 %v608, %v616
      %v623 = vadd.f32 %v609, %v617
      %v624 = vadd.f32 %v610, %v618
      %v625 = vmax.f32 %v619, 0.0
      %v626 = vmax.f32 %v620, 0.0
      %v627 = vmax.f32 %v621, 0.0
      %v628 = vmax.f32 %v622, 0.0
      %v629 = vmax.f32 %v623, 0.0
      %v630 = vmax.f32 %v624, 0.0
      %v631 = vmin.f32 %v625, 1.0
      %v632 = vmin.f32 %v626, 1.0
      %v633 = vmin.f32 %v627, 1.0
      %v634 = vmin.f32 %v628, 1.0
      %v635 = vmin.f32 %v629, 1.0
      %v636 = vmin.f32 %v630, 1.0
      %637 = vst [vmem:[#allocation2] sm:$0xff] %v631
      %638 = vst [vmem:[#allocation2 + $0x8] sm:$0xff] %v632
      %639 = vst [vmem:[#allocation2 + $0x10] sm:$0xff] %v633
      %640 = vst [vmem:[#allocation2 + $0x18] sm:$0xff] %v634
      %641 = vst [vmem:[#allocation2 + $0x20] sm:$0xff] %v635
      %642 = vst [vmem:[#allocation2 + $0x28] sm:$0xff] %v636
    $region53: #{tpu_custom_call.1} parent=1 // pred_fallthru
      _
    %v643 = vld [vmem:[#allocation2] sm:$0xff]
    %v644 = vld [vmem:[#allocation2 + $0x8] sm:$0xff]
    %v645 = vld [vmem:[#allocation2 + $0x10] sm:$0xff]
    %v646 = vld [vmem:[#allocation2 + $0x18] sm:$0xff]
    %v647 = vld [vmem:[#allocation2 + $0x20] sm:$0xff]
    %v648 = vld [vmem:[#allocation2 + $0x28] sm:$0xff]
    %v649 = vmul.f32 %v643, 0.2989
    %v650 = vmul.f32 %v644, 0.2989
    %v651 = vmul.f32 %v645, 0.587
    %v652 = vmul.f32 %v646, 0.587
    %v653 = vadd.f32 %v649, %v651
    %v654 = vadd.f32 %v650, %v652
    %v655 = vmul.f32 %v647, 0.114
    %v656 = vmul.f32 %v648, 0.114
    %v657 = vadd.f32 %v653, %v655
    %v658 = vadd.f32 %v654, %v656
    %v659 = vstv %s106
    %v660 = vmul.f32 %v659, %v643
    %v661 = vmul.f32 %v659, %v644
    %s662 = ssub.f32 1.0, %s106
    %v663 = vstv %s662
    %v664 = vmul.f32 %v663, %v657
    %v665 = vmul.f32 %v663, %v658
    %v666 = vadd.f32 %v660, %v664
    %v667 = vadd.f32 %v661, %v665
    %v668 = vmax.f32 %v666, 0.0
    %v669 = vmax.f32 %v667, 0.0
    %v670 = vmin.f32 %v668, 1.0
    %v671 = vmin.f32 %v669, 1.0
    %v672 = vsub.f32 %v670, 0.45
    %v673 = vsub.f32 %v671, 0.45
    %v674 = vmul.f32 %v672, 4.4444447
    %v675 = vmul.f32 %v673, 4.4444447
    %676 = vst [vmem:[#allocation14] sm:$0xff] %v674
    %677 = vst [vmem:[#allocation14 + $0x8] sm:$0xff] %v675
    %v678 = vmul.f32 %v659, %v645
    %v679 = vmul.f32 %v659, %v646
    %v680 = vadd.f32 %v678, %v664
    %v681 = vadd.f32 %v679, %v665
    %v682 = vmax.f32 %v680, 0.0
    %v683 = vmax.f32 %v681, 0.0
    %v684 = vmin.f32 %v682, 1.0
    %v685 = vmin.f32 %v683, 1.0
    %v686 = vsub.f32 %v684, 0.45
    %v687 = vsub.f32 %v685, 0.45
    %v688 = vmul.f32 %v686, 4.4444447
    %v689 = vmul.f32 %v687, 4.4444447
    %690 = vst [vmem:[#allocation14 + $0x10] sm:$0xff] %v688
    %691 = vst [vmem:[#allocation14 + $0x18] sm:$0xff] %v689
    %v692 = vmul.f32 %v659, %v647
    %v693 = vmul.f32 %v659, %v648
    %v694 = vadd.f32 %v692, %v664
    %v695 = vadd.f32 %v693, %v665
    %v696 = vmax.f32 %v694, 0.0
    %v697 = vmax.f32 %v695, 0.0
    %v698 = vmin.f32 %v696, 1.0
    %v699 = vmin.f32 %v697, 1.0
    %v700 = vsub.f32 %v698, 0.45
    %v701 = vsub.f32 %v699, 0.45
    %v702 = vmul.f32 %v700, 4.4444447
    %v703 = vmul.f32 %v701, 4.4444447
    %704 = vst [vmem:[#allocation14 + $0x20] sm:$0xff] %v702
    %705 = vst [vmem:[#allocation14 + $0x28] sm:$0xff] %v703
    // Predicated region
    $region54: #{tpu_custom_call.1} parent=1 // pred_check
      _
    $region55: #{tpu_custom_call.1} parent=1 // pred_check_branch
      %707 = sbr.rel (0) target = $region57
    $region56: #{tpu_custom_call.1} parent=1 // pred_region
      %s709 = ssub.s32 768, 768
      %710 = vsyncadd [#allocation5], %s709
      %s711 = sshll.u32 [#allocation14], 4
      %s712 = int_to_ptr.vmem [resolvable:$true] %s711
      %717 = dma.vmem_to_hbm [thread:$0]  %s712, 768, %s6, [#allocation5], 128, 128, 8
    $region57: #{tpu_custom_call.1} parent=1 // pred_fallthru
      _
    // Predicated region
    $region58: #{tpu_custom_call.1} parent=1 // pred_check
      _
    $region59: #{tpu_custom_call.1} parent=1 // pred_check_branch
      %719 = sbr.rel (0) target = $region61
    $region60: #{tpu_custom_call.1} parent=1 // pred_region
      %720 = dma.done [#allocation5], 768
    $region61: #{tpu_custom_call.1} parent=1 // pred_fallthru
      _
    %721 = vsyncpa [#allocation4], 1
    %722 = vsyncpa [#allocation9], 1
    %723 = vsyncpa [#allocation12], 1
    %724 = vsyncpa [#allocation5], 1
    %725 = vsyncpa [#allocation6], 1

</llo_original>
